<compile_context>
chip_gen: v6e
topology: v6e:2x2x1
jax: 0.10.0
libtpu: 0.0.40
codegen_flags: <defaults>
</compile_context>

<pallas_src>
import functools
import math

import jax
import jax.numpy as jnp
from jax.experimental import pallas as pl
from jax.experimental.pallas import tpu as pltpu


# ----------------------------------------------------------------------------
# Generation- / dtype-aware budgets
# ----------------------------------------------------------------------------
@functools.lru_cache(maxsize=None)
def _vmem_capacity_bytes():
    """Physical VMEM of the local TPU generation (conservative fallback)."""
    try:
        info = pltpu.get_tpu_info()
        for attr in ("vmem_capacity_bytes", "vmem_size_bytes", "vmem_bytes"):
            v = getattr(info, attr, None)
            if v:
                return int(v)
    except Exception:
        pass
    return 64 * 1024 * 1024  # assume the smallest generation (v7x) if unknown


@functools.lru_cache(maxsize=None)
def _budgets():
    """(per-block byte budget, scoped vmem_limit_bytes) for this generation."""
    cap = _vmem_capacity_bytes()
    if cap >= 128 * 1024 * 1024:                 # v5e / v6e: 128 MiB physical
        return 8 * 1024 * 1024, 96 * 1024 * 1024
    return 4 * 1024 * 1024, 48 * 1024 * 1024     # v7x: 64 MiB physical


def _block_budget_elems(dtype):
    # Byte budget -> element budget for the streamed dtype (bf16/int8 get
    # proportionally more elements so the block byte size stays constant).
    return _budgets()[0] // jnp.dtype(dtype).itemsize


def _compiler_params(dim_sem):
    return pltpu.CompilerParams(dimension_semantics=dim_sem,
                                vmem_limit_bytes=_budgets()[1])


def _sublane_multiple(dtype):
    # f32 -> 8, bf16 -> 16, int8/fp8 -> 32 (sub-32-bit dtypes pack along sublanes).
    return max(8, 32 // jnp.dtype(dtype).itemsize)


def _round_up(x, m):
    return ((x + m - 1) // m) * m


def _cdiv(a, b):
    return -(-a // b)


# ----------------------------------------------------------------------------
# Kernels
# ----------------------------------------------------------------------------
def _fused_rownorm_kernel(x_ref, o_ref, *, eps, inv_k):
    """Normalize each row of the (TR, K) block over its K elements (no affine)."""
    x = x_ref[...].astype(jnp.float32)
    mean = jnp.sum(x, axis=-1, keepdims=True) * inv_k
    xc = x - mean
    var = jnp.sum(xc * xc, axis=-1, keepdims=True) * inv_k
    o_ref[...] = (xc * jax.lax.rsqrt(var + eps)).astype(o_ref.dtype)


def _row_stats_kernel(x_ref, out_ref, *, k_total, tk, need_mask):
    """Accumulate per-row [sum, sum_sq] (packed along lanes) across the K axis."""
    k = pl.program_id(1)

    @pl.when(k == 0)
    def _():
        out_ref[...] = jnp.zeros_like(out_ref)

    x = x_ref[...].astype(jnp.float32)

    def acc(xv):
        out_ref[...] += jnp.concatenate(
            [jnp.sum(xv, axis=-1, keepdims=True),
             jnp.sum(xv * xv, axis=-1, keepdims=True)], axis=-1)

    if need_mask:
        last = pl.num_programs(1) - 1

        @pl.when(k == last)          # mask columns past the row length — edge block only
        def _():
            col = k * tk + jax.lax.broadcasted_iota(jnp.int32, x.shape, 1)
            acc(jnp.where(col < k_total, x, 0.0))

        @pl.when(k != last)
        def _():
            acc(x)
    else:
        acc(x)


def _apply_rows_kernel(ss_ref, x_ref, o_ref):
    """y = x * scale_row + shift_row; scale/shift packed as one (TR, 2) block."""
    ss = ss_ref[...]
    y = x_ref[...].astype(jnp.float32) * ss[:, 0:1] + ss[:, 1:2]
    o_ref[...] = y.astype(o_ref.dtype)


def _apply_lanes_kernel(ss_ref, x_ref, o_ref):
    """y = x * scale_lane + shift_lane; scale/shift packed as one (2, TK) block."""
    ss = ss_ref[...]
    y = x_ref[...].astype(jnp.float32) * ss[0:1, :] + ss[1:2, :]
    o_ref[...] = y.astype(o_ref.dtype)


# ----------------------------------------------------------------------------
# pallas_call wrappers
# ----------------------------------------------------------------------------
def _split_tiles(R, K, dtype, tile_k=None):
    """(TR, TK) tiling for the row-blocked (R, K) layout."""
    sub = _sublane_multiple(dtype)
    budget = _block_budget_elems(dtype)
    if tile_k is not None:
        TK = tile_k
    elif sub * K <= budget:
        TK = K                                   # whole row per block: contiguous DMA
    else:
        TK = max(128, (budget // 256) // 128 * 128)
    TR = max(sub, min(_round_up(R, sub), (budget // TK) // sub * sub, 4096))
    if R >= 2 * sub:                             # >= 2 row blocks so both v7x TCs get work
        TR = min(TR, _round_up(_cdiv(R, 2), sub))
    return TR, TK


def _dense_tile_k(N, CS, dtype):
    """Lane tile for the (N, CS) layout (all N rows kept in one block)."""
    budget = _block_budget_elems(dtype)
    tk = max(128, (budget // max(N, 1)) // 128 * 128)
    if CS >= 256:                                # >= 2 lane blocks for the 2-core grid
        tk = min(tk, _round_up(_cdiv(CS, 2), 128))
    return CS if CS <= tk else tk


def _dense_path_ok(N, dtype):
    return N * 128 <= _block_budget_elems(dtype)


def _row_stats(x2d, *, tile_k=None):
    """x2d: (R, K). Returns per-row (sum, sum_sq) float32 vectors of shape (R,)."""
    R, K = x2d.shape
    TR, TK = _split_tiles(R, K, x2d.dtype, tile_k)
    need_mask = (K % TK) != 0
    # NOTE: default double-buffering; add pipeline_mode=pl.Buffered(3) on the x
    # BlockSpec only if profiling shows exposed DMA between short K steps.
    out = pl.pallas_call(
        functools.partial(_row_stats_kernel, k_total=K, tk=TK, need_mask=need_mask),
        out_shape=jax.ShapeDtypeStruct((R, 2), jnp.float32),
        grid=(pl.cdiv(R, TR), pl.cdiv(K, TK)),
        in_specs=[pl.BlockSpec((TR, TK), lambda i, k: (i, k))],
        out_specs=pl.BlockSpec((TR, 2), lambda i, k: (i, 0)),
        compiler_params=_compiler_params(("parallel", "arbitrary")),
    )(x2d)
    return out[:, 0], out[:, 1]


def _apply_rows(x2d, scale_rows, shift_rows, *, tile_k=None):
    """y[r, :] = x[r, :] * scale[r] + shift[r]."""
    R, K = x2d.shape
    TR, TK = _split_tiles(R, K, x2d.dtype, tile_k)
    ss = jnp.stack([scale_rows.astype(jnp.float32),
                    shift_rows.astype(jnp.float32)], axis=-1)      # (R, 2)
    return pl.pallas_call(
        _apply_rows_kernel,
        out_shape=jax.ShapeDtypeStruct((R, K), x2d.dtype),
        grid=(pl.cdiv(R, TR), pl.cdiv(K, TK)),
        in_specs=[pl.BlockSpec((TR, 2), lambda i, k: (i, 0)),
                  pl.BlockSpec((TR, TK), lambda i, k: (i, k))],
        out_specs=pl.BlockSpec((TR, TK), lambda i, k: (i, k)),
        compiler_params=_compiler_params(("parallel", "parallel")),
    )(ss, x2d)


def _apply_lanes(x2d, scale_lanes, shift_lanes):
    """y[n, j] = x[n, j] * scale[j] + shift[j]; x2d is (N, CS), lane-dense."""
    N, CS = x2d.shape
    TK = _dense_tile_k(N, CS, x2d.dtype)
    ss = jnp.stack([scale_lanes.astype(jnp.float32),
                    shift_lanes.astype(jnp.float32)], axis=0)      # (2, CS)
    return pl.pallas_call(
        _apply_lanes_kernel,
        out_shape=jax.ShapeDtypeStruct((N, CS), x2d.dtype),
        grid=(pl.cdiv(CS, TK),),
        in_specs=[pl.BlockSpec((2, TK), lambda k: (0, k)),
                  pl.BlockSpec((N, TK), lambda k: (0, k))],
        out_specs=pl.BlockSpec((N, TK), lambda k: (0, k)),
        compiler_params=_compiler_params(("parallel",)),
    )(ss, x2d)


def _instance_norm_rows(x2d, eps):
    """Per-row normalization with no affine (InstanceNorm default affine=False)."""
    R, K = x2d.shape
    sub = _sublane_multiple(x2d.dtype)
    budget = _block_budget_elems(x2d.dtype)

    if K * sub > budget:
        # Row too long even for one sublane-group of rows: K-blocked two-pass fallback.
        s, sq = _row_stats(x2d)
        mean = s / K
        var = jnp.maximum(sq / K - mean * mean, 0.0)
        rstd = jax.lax.rsqrt(var + eps)
        return _apply_rows(x2d, rstd, -mean * rstd)

    TR = max(sub, min(_round_up(R, sub), (budget // K) // sub * sub, 4096))
    if R >= 2 * sub:                             # >= 2 row blocks for v7x's 2 TCs
        TR = min(TR, _round_up(_cdiv(R, 2), sub))
    return pl.pallas_call(
        functools.partial(_fused_rownorm_kernel, eps=float(eps), inv_k=1.0 / float(K)),
        out_shape=jax.ShapeDtypeStruct((R, K), x2d.dtype),
        grid=(pl.cdiv(R, TR),),
        in_specs=[pl.BlockSpec((TR, K), lambda i: (i, 0))],
        out_specs=pl.BlockSpec((TR, K), lambda i: (i, 0)),
        compiler_params=_compiler_params(("parallel",)),
    )(x2d)


# ----------------------------------------------------------------------------
# Norm module (mirrors the PyTorch wrapper)
# ----------------------------------------------------------------------------
class Norm:
    def __init__(self, channels, norm='batch', type='1d', G=None, key=None):
        if norm in ('batch', 'instance'):
            if type not in ('1d', '2d'):
                raise ValueError('Unimplemented Norm type.')
        elif norm == 'group':
            if G is None:
                raise ValueError('if norm == group, G must not be None.')
        else:
            raise ValueError('Unimplemented Norm type.')

        self.norm = norm
        self.type = type
        self.G = G
        self.channels = channels
        self.eps = 1e-5

        # Affine params exist for BatchNorm / GroupNorm (affine=True);
        # InstanceNorm1d/2d default affine=False -> no parameters.
        if norm in ('batch', 'group'):
            if key is None:
                key = jax.random.PRNGKey(0)
            kw, kb = jax.random.split(key)
            self.weight = 1.0 + 0.1 * jax.random.normal(kw, (channels,), jnp.float32)
            self.bias = 0.1 * jax.random.normal(kb, (channels,), jnp.float32)
        else:
            self.weight = None
            self.bias = None

    def __call__(self, x):
        x = jnp.asarray(x)
        N, C = x.shape[0], x.shape[1]
        spatial = x.shape[2:]
        S = int(math.prod(spatial)) if spatial else 1
        eps = self.eps

        if self.norm == 'instance':
            y = _instance_norm_rows(x.reshape(N * C, S), eps)
            return y.reshape(x.shape)

        if self.norm == 'batch':
            # Stats: per-(n,c) partial sums on native (N*C, S) rows (contiguous
            # DMA), combined over N on a tiny (N, C) array in plain JAX.
            # NOTE: var = E[x^2] - mean^2 in f32; fine for typical inputs.
            s, sq = _row_stats(x.reshape(N * C, S))
            cnt = float(N * S)
            s_c = jnp.sum(s.reshape(N, C), axis=0)
            sq_c = jnp.sum(sq.reshape(N, C), axis=0)
            mean_c = s_c / cnt
            var_c = jnp.maximum(sq_c / cnt - mean_c * mean_c, 0.0)
            rstd_c = jax.lax.rsqrt(var_c + eps)
            scale_c = rstd_c * self.weight
            shift_c = self.bias - mean_c * scale_c

            if _dense_path_ok(N, x.dtype):
                # Lane-dense apply on (N, C*S): per-lane scale/shift of length
                # C*S (channel value repeated S times) broadcast across rows —
                # avoids masked partial stores when S < 128.
                scale_l = jnp.repeat(scale_c, S)
                shift_l = jnp.repeat(shift_c, S)
                y = _apply_lanes(x.reshape(N, C * S), scale_l, shift_l)
                return y.reshape(x.shape)

            # Fallback for very large batch: per-row apply on (N*C, S).
            scale = jnp.broadcast_to(scale_c[None, :], (N, C)).reshape(N * C)
            shift = jnp.broadcast_to(shift_c[None, :], (N, C)).reshape(N * C)
            y = _apply_rows(x.reshape(N * C, S), scale, shift)
            return y.reshape(x.shape)

        # group norm: statistics directly on the (N*G, Cg*S) row layout
        # (lane-denser rows, no channel combine needed), then a per-(n,c)
        # scale/shift apply on (N*C, S) rows (affine weight varies per channel).
        G = self.G
        Cg = C // G
        s_g, sq_g = _row_stats(x.reshape(N * G, Cg * S))            # (N*G,)
        cnt = float(Cg * S)
        mean_g = s_g / cnt
        var_g = jnp.maximum(sq_g / cnt - mean_g * mean_g, 0.0)
        rstd_g = jax.lax.rsqrt(var_g + eps)
        rstd_nc = jnp.repeat(rstd_g.reshape(N, G), Cg, axis=1)      # (N, C)
        mean_nc = jnp.repeat(mean_g.reshape(N, G), Cg, axis=1)
        scale = (rstd_nc * self.weight[None, :]).reshape(N * C)
        shift = (self.bias[None, :] - mean_nc * rstd_nc * self.weight[None, :]).reshape(N * C)
        y = _apply_rows(x.reshape(N * C, S), scale, shift)
        return y.reshape(x.shape)


# ----------------------------------------------------------------------------
# Pure-JAX references (verification)
# ----------------------------------------------------------------------------
def _ref(x, norm, G=None, weight=None, bias=None, eps=1e-5):
    x = x.astype(jnp.float32)
    if norm == 'batch':
        axes = (0,) + tuple(range(2, x.ndim))
        mean = jnp.mean(x, axis=axes, keepdims=True)
        var = jnp.mean((x - mean) ** 2, axis=axes, keepdims=True)
        shape = [1, x.shape[1]] + [1] * (x.ndim - 2)
        return (x - mean) / jnp.sqrt(var + eps) * weight.reshape(shape) + bias.reshape(shape)
    elif norm == 'instance':
        axes = tuple(range(2, x.ndim))
        mean = jnp.mean(x, axis=axes, keepdims=True)
        var = jnp.mean((x - mean) ** 2, axis=axes, keepdims=True)
        return (x - mean) / jnp.sqrt(var + eps)
    else:
        N, C = x.shape[0], x.shape[1]
        spatial = x.shape[2:]
        xr = x.reshape(N, G, -1)
        mean = jnp.mean(xr, axis=-1, keepdims=True)
        var = jnp.mean((xr - mean) ** 2, axis=-1, keepdims=True)
        y = ((xr - mean) / jnp.sqrt(var + eps)).reshape(x.shape)
        shape = [1, C] + [1] * len(spatial)
        return y * weight.reshape(shape) + bias.reshape(shape)


if __name__ == "__main__":
    key = jax.random.PRNGKey(0)
    k1, k2, k3, kp = jax.random.split(key, 4)

    x1d = jax.random.normal(k1, (2, 4, 16), jnp.float32)        # (N, C, L)
    x2d = jax.random.normal(k2, (2, 4, 16, 16), jnp.float32)    # (N, C, H, W)

    cases = [
        ("batch-1d", Norm(4, norm='batch', type='1d', key=kp), x1d),
        ("batch-2d", Norm(4, norm='batch', type='2d', key=kp), x2d),
        ("instance-1d", Norm(4, norm='instance', type='1d'), x1d),
        ("instance-2d", Norm(4, norm='instance', type='2d'), x2d),
        ("group", Norm(4, norm='group', G=2, key=kp), x1d),
    ]

    for name, mod, xin in cases:
        out = jax.block_until_ready(mod(xin))
        ref = _ref(xin, mod.norm, G=mod.G, weight=mod.weight, bias=mod.bias, eps=mod.eps)
        assert out.shape == xin.shape, (name, out.shape, xin.shape)
        err = float(jnp.max(jnp.abs(out - ref)))
        assert err < 1e-4, (name, err)

    # Explicitly exercise the K-blocked two-pass path (multiple K tiles +
    # edge-only masking), which production-sized rows would hit.
    xr = jax.random.normal(k3, (8, 200), jnp.float32)   # K=200, tile_k=128 -> 2 tiles, masked edge
    s, sq = _row_stats(xr, tile_k=128)
    mean = s / xr.shape[1]
    var = jnp.maximum(sq / xr.shape[1] - mean * mean, 0.0)
    rstd = jax.lax.rsqrt(var + 1e-5)
    y_split = jax.block_until_ready(_apply_rows(xr, rstd, -mean * rstd, tile_k=128))
    m_ref = jnp.mean(xr, axis=-1, keepdims=True)
    v_ref = jnp.mean((xr - m_ref) ** 2, axis=-1, keepdims=True)
    y_ref = (xr - m_ref) / jnp.sqrt(v_ref + 1e-5)
    err = float(jnp.max(jnp.abs(y_split - y_ref)))
    assert err < 1e-4, ("split-path", err)

    print("KERNEL_OK")
</pallas_src>

<mosaic_0001>
module attributes {stable_mosaic.version = 11 : i64} {
  func.func @_row_stats_kernel(%arg0: i32, %arg1: i32, %arg2: memref<8x16xf32, #tpu.memory_space<vmem>>, %arg3: memref<8x2xf32, #tpu.memory_space<vmem>>) attributes {dimension_semantics = [#tpu.dimension_semantics<parallel>, #tpu.dimension_semantics<arbitrary>], iteration_bounds = array<i64: 1, 1>, scalar_prefetch = 0 : i64, scratch_operands = 0 : i64, tpu.core_type = #tpu.core_type<tc>, window_params = [{transform_indices = @transform_0, window_bounds = array<i64: 8, 16>}, {transform_indices = @transform_1, window_bounds = array<i64: 8, 2>}]} {
    %c0_i32 = arith.constant 0 : i32
    %0 = arith.cmpi eq, %arg1, %c0_i32 : i32
    %1 = arith.extui %0 : i1 to i32
    %c0_i32_0 = arith.constant 0 : i32
    %2 = arith.cmpi ne, %1, %c0_i32_0 : i32
    scf.if %2 {
      %cst_7 = arith.constant 0.000000e+00 : f32
      %13 = vector.broadcast %cst_7 : f32 to vector<8x2xf32>
      %c0_8 = arith.constant 0 : index
      %c0_9 = arith.constant 0 : index
      %14 = vector.load %arg3[%c0_8, %c0_9] : memref<8x2xf32, #tpu.memory_space<vmem>>, vector<8x2xf32>
      tpu.vector_store %arg3[%c0_8, %c0_9], %13 {strides = array<i32>} : memref<8x2xf32, #tpu.memory_space<vmem>>, vector<8x2xf32>,
    } else {
    }
    %c0 = arith.constant 0 : index
    %c0_1 = arith.constant 0 : index
    %3 = vector.load %arg2[%c0, %c0_1] : memref<8x16xf32, #tpu.memory_space<vmem>>, vector<8x16xf32>
    %c0_2 = arith.constant 0 : index
    %c0_3 = arith.constant 0 : index
    %4 = vector.load %arg3[%c0_2, %c0_3] : memref<8x2xf32, #tpu.memory_space<vmem>>, vector<8x2xf32>
    %cst = arith.constant dense<0.000000e+00> : vector<8xf32>
    %5 = vector.multi_reduction <add>, %3, %cst [1] : vector<8x16xf32> to vector<8xf32>
    %6 = vector.shape_cast %5 : vector<8xf32> to vector<8x1xf32>
    %7 = arith.mulf %3, %3 : vector<8x16xf32>
    %cst_4 = arith.constant dense<0.000000e+00> : vector<8xf32>
    %8 = vector.multi_reduction <add>, %7, %cst_4 [1] : vector<8x16xf32> to vector<8xf32>
    %9 = vector.shape_cast %8 : vector<8xf32> to vector<8x1xf32>
    %10 = tpu.concatenate %6, %9 in 1 : vector<8x1xf32>, vector<8x1xf32> -> vector<8x2xf32>
    %11 = arith.addf %4, %10 : vector<8x2xf32>
    %c0_5 = arith.constant 0 : index
    %c0_6 = arith.constant 0 : index
    %12 = vector.load %arg3[%c0_5, %c0_6] : memref<8x2xf32, #tpu.memory_space<vmem>>, vector<8x2xf32>
    tpu.vector_store %arg3[%c0_5, %c0_6], %11 {strides = array<i32>} : memref<8x2xf32, #tpu.memory_space<vmem>>, vector<8x2xf32>,
    return
  }
  func.func @transform_0(%arg0: i32, %arg1: i32) -> (i32, i32) {
    %c0_i32 = arith.constant 0 : i32
    return %arg0, %arg1 : i32, i32
  }
  func.func @transform_1(%arg0: i32, %arg1: i32) -> (i32, i32) {
    %c0_i32 = arith.constant 0 : i32
    %c0_i32_0 = arith.constant 0 : i32
    return %arg0, %c0_i32 : i32, i32
  }
}

</mosaic_0001>

<llo_original>
// kernel: tpu_custom_call.1
$region0: #{tpu_custom_call.1}
  #allocation0 [shape = 'u32[]', space=smem, size = 0x4, offset = 0x4, fixed_abs, tag = 'smem constant byte address 0x4 - core index']
  #allocation1 [shape = 'u32[144,128]{1,0:T(1,128)}', space=vmem, size = 0x12000, scoped, tag = 'internal scratch']
  %s0 = inlined_call_operand.hbm [shape: f32[8,16], index: 0, kind: input, shape index: {}]
  %s1 = inlined_call_operand.vmem [shape: f32[8,2], index: 1, kind: output, shape index: {}]
  %s2 = sld [smem:[#allocation0]]
  $region22: #{tpu_custom_call.1} parent=0
    _
  %s4 = ssub.s32 1, %s2
  %s5 = scalar_select 0, %s4, %s2
  $region1: #{tpu_custom_call.1} parent=0
    #allocation2 [shape = 'u8[4096]{0}', space=vmem, size = 0x1000, scoped, tag = 'input window, operand 0, single buffered']
    #allocation3 [shape = 's32[1]{0}', space=sflag, size = 0x4, scoped, tag = 'scoped memory for tpu_custom_call.1']
    %6 = vsyncpa [#allocation3], 0
    // Predicated region
    $region2: #{tpu_custom_call.1} parent=1 // pred_check
      _
    $region3: #{tpu_custom_call.1} parent=1 // pred_check_branch
      %8 = sbr.rel (0) target = $region5
    $region4: #{tpu_custom_call.1} parent=1 // pred_region
      %s10 = ssub.s32 128, 128
      %11 = vsyncadd [#allocation3], %s10
      %s13 = sshll.u32 [#allocation2], 4
      %s14 = int_to_ptr.vmem [resolvable:$true] %s13
      %16 = dma.hbm_to_vmem [thread:$0]  %s0, 128, %s14, [#allocation3]
    $region5: #{tpu_custom_call.1} parent=1 // pred_fallthru
      _
    // Predicated region
    $region6: #{tpu_custom_call.1} parent=1 // pred_check
      _
    $region7: #{tpu_custom_call.1} parent=1 // pred_check_branch
      %18 = sbr.rel (0) target = $region9
    $region8: #{tpu_custom_call.1} parent=1 // pred_region
      %19 = dma.done [#allocation3], 128
    $region9: #{tpu_custom_call.1} parent=1 // pred_fallthru
      _
    %p20 = scmp.eq.s32.totalorder 0, 0
    // Predicated region
    $region10: #{tpu_custom_call.1} parent=1 // pred_check
      %p21 = pneg %p20
    $region11: #{tpu_custom_call.1} parent=1 // pred_check_branch
      %23 = sbr.rel (%p21) target = $region13
    $region12: #{tpu_custom_call.1} parent=1 // pred_region
      %vm24 = vcmask 15360
      %25 = vst.msk [vmem:[%s1] sm:$0xff] %vm24, 0.0
    $region13: #{tpu_custom_call.1} parent=1 // pred_fallthru
      _
    %v26 = vld [vmem:[#allocation2] sm:$0xff]
    %v27 = vld [vmem:[%s1] sm:$0xff]
    %vm28 = vcmask 130048
    %v29 = vsel %vm28, %v26, 0.0
    %30 = vadd.xlane.f32.xlu0 %v29
    %v31 = vpop.xlane.xlu0 %30
    %v32 = vmul.f32 %v26, %v26
    %v33 = vsel %vm28, %v32, 0.0
    %34 = vadd.xlane.f32.xlu0 %v33
    %v35 = vpop.xlane.xlu0 %34
    %vm36 = vcmask 7168
    %v37 = vsel %vm36, %v31, %v35
    %v38 = vadd.f32 %v27, %v37
    %vm39 = vcmask 15360
    %40 = vst.msk [vmem:[%s1] sm:$0xff] %vm39, %v38
    // Predicated region
    $region14: #{tpu_custom_call.1} parent=1 // pred_check
      _
    $region15: #{tpu_custom_call.1} parent=1 // pred_check_branch
      %42 = sbr.rel (0) target = $region17
    $region16: #{tpu_custom_call.1} parent=1 // pred_region
      _
    $region17: #{tpu_custom_call.1} parent=1 // pred_fallthru
      _
    // Predicated region
    $region18: #{tpu_custom_call.1} parent=1 // pred_check
      _
    $region19: #{tpu_custom_call.1} parent=1 // pred_check_branch
      %44 = sbr.rel (0) target = $region21
    $region20: #{tpu_custom_call.1} parent=1 // pred_region
      _
    $region21: #{tpu_custom_call.1} parent=1 // pred_fallthru
      _
    %45 = vsyncpa [#allocation3], 1

</llo_original>
